<compile_context>
chip_gen: v7x
topology: tpu7x:2x2x1
jax: 0.10.0
libtpu: 0.0.40
codegen_flags: <defaults>
</compile_context>

<pallas_src>
import functools
from itertools import product

import jax
import jax.numpy as jnp
from jax.experimental import pallas as pl
from jax.experimental.pallas import tpu as pltpu

_EPS = 1e-5
_MIN_TILE_BYTES = 2 * 1024 * 1024  # don't shrink blocks below this just to lengthen the grid


def _sublane_quantum(dtype):
    """Sublane packing quantum for the second-to-last block dim (8/16/32)."""
    return max(8, 32 // jnp.dtype(dtype).itemsize)


def _physical_vmem_bytes():
    """Physical VMEM per TensorCore; conservative 64 MiB (v7x) if unknown."""
    try:
        info = pltpu.get_tpu_info()
        for attr in ("vmem_capacity_bytes", "vmem_bytes", "vmem_size_bytes"):
            v = getattr(info, attr, None)
            if v:
                return int(v)
    except Exception:
        pass
    return 64 * 1024 * 1024


def _vmem_limit_bytes():
    """Scoped-VMEM limit to request: ~75% of physical, clamped to [32, 112] MiB.
    => ~48 MiB on v7x (64 MiB physical), ~96 MiB on v5e/v6e (128 MiB physical)."""
    phys = _physical_vmem_bytes()
    return max(32 * 1024 * 1024, min((phys * 3) // 4, 112 * 1024 * 1024))


def _pick_tile(dim, quantum, max_size):
    """Largest divisor of `dim` that is a multiple of `quantum` and <= max_size.

    Falls back to the full `dim` (always layout-legal as a full-extent block)
    when no such divisor exists.
    """
    best = None
    limit = min(dim, max_size)
    d = quantum
    while d <= limit:
        if dim % d == 0:
            best = d
        d += quantum
    return best if best is not None else dim


# ----------------------------------------------------------------------------
# Fused single-pass kernel: whole (N, tc, H*W) channel slice resident in VMEM.
# Numerically stable: mean first, then variance of the centered copy.
# ----------------------------------------------------------------------------
def _bn_fused_kernel(x_ref, gamma_ref, beta_ref, o_ref, *, inv_count, eps):
    # x_ref/o_ref: (N, tc, HW); gamma_ref/beta_ref: (tc, 1)
    x = x_ref[...].astype(jnp.float32)
    mean = jnp.sum(x, axis=(0, 2), keepdims=True) * inv_count          # (1, tc, 1)
    xc = x - mean
    var = jnp.sum(xc * xc, axis=(0, 2), keepdims=True) * inv_count     # (1, tc, 1)
    rstd = jax.lax.rsqrt(var + eps)
    scale = gamma_ref[...][None].astype(jnp.float32) * rstd            # (1, tc, 1)
    o_ref[...] = (xc * scale + beta_ref[...][None].astype(jnp.float32)).astype(o_ref.dtype)


# ----------------------------------------------------------------------------
# Two-pass path for large N*H*W: (N, HW)-tiled stats reduction + streamed
# normalize. Stats use streaming sum / sum-of-squares (single read of x);
# acceptable for BN activation statistics with f32 accumulation.
# ----------------------------------------------------------------------------
def _bn_stats_kernel(x_ref, mean_ref, rstd_ref, sum_acc, sq_acc, *, inv_count, eps):
    # x_ref: (tn, tc, tm); mean/rstd/scratch: (tc, 1)
    n = pl.program_id(1)
    m = pl.program_id(2)

    @pl.when((n == 0) & (m == 0))
    def _():
        sum_acc[...] = jnp.zeros_like(sum_acc)
        sq_acc[...] = jnp.zeros_like(sq_acc)

    x = x_ref[...].astype(jnp.float32)
    sum_acc[...] += jnp.sum(x, axis=(0, 2), keepdims=True)[0]      # (tc, 1)
    sq_acc[...] += jnp.sum(x * x, axis=(0, 2), keepdims=True)[0]   # (tc, 1)

    @pl.when((n == pl.num_programs(1) - 1) & (m == pl.num_programs(2) - 1))
    def _():
        mean = sum_acc[...] * inv_count
        var = jnp.maximum(sq_acc[...] * inv_count - mean * mean, 0.0)
        mean_ref[...] = mean
        rstd_ref[...] = jax.lax.rsqrt(var + eps)


def _bn_norm_kernel(x_ref, scale_ref, shift_ref, o_ref):
    # x_ref/o_ref: (tn, tc, tm); scale/shift: (tc, 1) f32.
    # No full-tile astype of x: rely on elementwise promotion against the
    # broadcast f32 scale/shift (keeps VMEM footprint down, esp. for bf16).
    scale = scale_ref[...][None]   # (1, tc, 1)
    shift = shift_ref[...][None]
    o_ref[...] = (x_ref[...] * scale + shift).astype(o_ref.dtype)


def batchnorm2d_pallas(x, gamma, beta, *, eps=_EPS,
                       force_two_pass=False, block_elems_cap=None):
    """Training-mode BatchNorm2d forward (batch statistics). x is NCHW."""
    N, C, H, W = x.shape
    HW = H * W
    M = N * HW
    inv_count = 1.0 / float(M)

    in_b = jnp.dtype(x.dtype).itemsize
    out_b = in_b
    quantum = _sublane_quantum(x.dtype)

    vmem_limit = _vmem_limit_bytes()
    vmem_budget = int(vmem_limit * 0.8)   # headroom inside the requested limit
    elems_total = N * C * HW

    # Free, contiguous layout change (no HBM round trip, unlike a transpose).
    x3 = x.reshape(N, C, HW)
    g2 = gamma.reshape(C, 1).astype(jnp.float32)
    b2 = beta.reshape(C, 1).astype(jnp.float32)

    # ---- single-pass channel-tiled path -------------------------------------
    # Per-element resident bytes: 2x double-buffered input + 2x double-buffered
    # output + two full-tile f32 temporaries (upcast copy and centered copy).
    per_elem_fused = 2 * in_b + 2 * out_b + 8
    max_fused_elems = max(1, vmem_budget // per_elem_fused)
    if block_elems_cap is not None:
        max_fused_elems = min(max_fused_elems, int(block_elems_cap))

    chan_slice = N * HW
    max_tc = max(1, max_fused_elems // max(1, chan_slice))
    tc = _pick_tile(C, quantum, max_tc)
    fused_ok = (not force_two_pass) and (N * tc * HW <= max_fused_elems)

    if fused_ok:
        # Prefer a grid of length >= 2 (pipelining; megacore sharding on v7x)
        # as long as each block stays comfortably large.
        if C // tc < 2:
            tc_alt = _pick_tile(C, quantum, C // 2)
            if tc_alt < C and N * tc_alt * HW * in_b >= _MIN_TILE_BYTES:
                tc = tc_alt

        kernel = functools.partial(_bn_fused_kernel, inv_count=inv_count, eps=eps)
        ce = pl.CostEstimate(flops=6 * elems_total, transcendentals=0,
                             bytes_accessed=elems_total * (in_b + out_b) + 8 * C)
        y3 = pl.pallas_call(
            kernel,
            out_shape=jax.ShapeDtypeStruct((N, C, HW), x.dtype),
            grid=(C // tc,),
            in_specs=[
                pl.BlockSpec((N, tc, HW), lambda c: (0, c, 0)),
                pl.BlockSpec((tc, 1), lambda c: (c, 0)),
                pl.BlockSpec((tc, 1), lambda c: (c, 0)),
            ],
            out_specs=pl.BlockSpec((N, tc, HW), lambda c: (0, c, 0)),
            compiler_params=pltpu.CompilerParams(
                dimension_semantics=("parallel",),
                vmem_limit_bytes=vmem_limit),
            cost_estimate=ce,
        )(x3, g2, b2)
        return y3.reshape(N, C, H, W)

    # ---- two-pass path: (N, HW)-tiled stats reduction, then streamed norm ---
    # Budget with the heavier (normalize) pass: 2x in + 2x out + f32 promote.
    per_elem_tp = 2 * in_b + 2 * out_b + 4
    max_tp_elems = max(1, vmem_budget // per_elem_tp)
    if block_elems_cap is not None:
        max_tp_elems = min(max_tp_elems, int(block_elems_cap))

    # HW tile: largest multiple-of-128 divisor within budget; full HW if none
    # exists (common CNN sizes 49/196/784/3136). The extra N grid axis keeps
    # the block within budget in that fallback case.
    tm = _pick_tile(HW, 128, max(128, max_tp_elems // quantum))
    rem = max(1, max_tp_elems // tm)
    tc2 = _pick_tile(C, quantum, rem)
    tn = _pick_tile(N, 1, max(1, rem // tc2))

    grid = (C // tc2, N // tn, HW // tm)

    stats_kernel = functools.partial(_bn_stats_kernel, inv_count=inv_count, eps=eps)
    stats_ce = pl.CostEstimate(flops=3 * elems_total, transcendentals=0,
                               bytes_accessed=elems_total * in_b + 8 * C)
    mean, rstd = pl.pallas_call(
        stats_kernel,
        out_shape=(jax.ShapeDtypeStruct((C, 1), jnp.float32),
                   jax.ShapeDtypeStruct((C, 1), jnp.float32)),
        grid=grid,
        in_specs=[pl.BlockSpec((tn, tc2, tm), lambda c, n, m: (n, c, m))],
        out_specs=(pl.BlockSpec((tc2, 1), lambda c, n, m: (c, 0)),
                   pl.BlockSpec((tc2, 1), lambda c, n, m: (c, 0))),
        scratch_shapes=[pltpu.VMEM((tc2, 1), jnp.float32),
                        pltpu.VMEM((tc2, 1), jnp.float32)],
        compiler_params=pltpu.CompilerParams(
            dimension_semantics=("parallel", "arbitrary", "arbitrary"),
            vmem_limit_bytes=vmem_limit),
        cost_estimate=stats_ce,
    )(x3)

    # Fold mean/rstd/gamma/beta into one per-channel (scale, shift) pair with a
    # trivial C-sized op so the streaming normalize pass carries fewer inputs.
    scale = g2 * rstd
    shift = b2 - mean * scale

    norm_ce = pl.CostEstimate(flops=2 * elems_total, transcendentals=0,
                              bytes_accessed=elems_total * (in_b + out_b) + 8 * C)
    y3 = pl.pallas_call(
        _bn_norm_kernel,
        out_shape=jax.ShapeDtypeStruct((N, C, HW), x.dtype),
        grid=grid,
        in_specs=[
            pl.BlockSpec((tn, tc2, tm), lambda c, n, m: (n, c, m)),
            pl.BlockSpec((tc2, 1), lambda c, n, m: (c, 0)),
            pl.BlockSpec((tc2, 1), lambda c, n, m: (c, 0)),
        ],
        out_specs=pl.BlockSpec((tn, tc2, tm), lambda c, n, m: (n, c, m)),
        compiler_params=pltpu.CompilerParams(
            dimension_semantics=("parallel", "parallel", "parallel"),
            vmem_limit_bytes=vmem_limit),
        cost_estimate=norm_ce,
    )(x3, scale, shift)
    return y3.reshape(N, C, H, W)


# ----------------------------------------------------------------------------
# SwitchBatchNorm2d: mirrors the PyTorch module's bit-list bookkeeping; each
# bit config owns its own (gamma, beta) pair, and forward dispatches on abit.
# ----------------------------------------------------------------------------
_first_bn = True


class SwitchBatchNorm2d:
    def __init__(self, num_features, bit_list, Trans_BN=False):
        global _first_bn
        self.Trans_BN = Trans_BN
        self.first_bn_ = False
        if self.Trans_BN:
            if _first_bn:
                self.first_bn_ = True
                self.bit_list = bit_list
                _first_bn = False
            else:
                self.bit_list = list(product(bit_list, repeat=2))
        else:
            self.bit_list = bit_list

        # PyTorch default init is gamma=1, beta=0; add a tiny deterministic
        # per-branch offset so the selected branch is observable.
        self.bn_params = {}
        for idx, key in enumerate(self.bit_list):
            gamma = jnp.full((num_features,), 1.0 + 0.01 * idx, dtype=jnp.float32)
            beta = jnp.full((num_features,), 0.001 * idx, dtype=jnp.float32)
            self.bn_params[str(key)] = (gamma, beta)
        # TODO(synk): running_mean/running_var updates (training-side bookkeeping)
        # are side effects that don't affect this forward output; not modeled.

        self.abit = self.bit_list[-1]
        self.wbit = self.bit_list[-1]
        if self.abit != self.wbit:
            raise ValueError(
                'Currenty only support same activation and weight bit width!')
        self.sigma = 0  # TODO(synk): sigma>0 stochastic bit switching relies on an external global; not modeled.

    def __call__(self, x):
        if self.Trans_BN:
            if self.first_bn_:
                key = str(self.abit)
            else:
                key = str((self.abit, self.abit))
        else:
            key = str(self.abit)
        gamma, beta = self.bn_params[key]
        return batchnorm2d_pallas(x, gamma, beta)


def _reference_bn(x, gamma, beta):
    mean = jnp.mean(x, axis=(0, 2, 3), keepdims=True)
    var = jnp.mean((x - mean) ** 2, axis=(0, 2, 3), keepdims=True)
    g = gamma.reshape(1, -1, 1, 1)
    b = beta.reshape(1, -1, 1, 1)
    return (x - mean) / jnp.sqrt(var + _EPS) * g + b


if __name__ == "__main__":
    key = jax.random.PRNGKey(0)
    N, C, H, W = 2, 4, 16, 16
    x = jax.random.normal(key, (N, C, H, W), dtype=jnp.float32)

    bit_list = [4, 8]
    module = SwitchBatchNorm2d(num_features=C, bit_list=bit_list, Trans_BN=False)

    y = jax.block_until_ready(module(x))

    gamma, beta = module.bn_params[str(module.abit)]
    y_ref = _reference_bn(x, gamma, beta)
    assert y.shape == (N, C, H, W)
    assert jnp.allclose(y, y_ref, atol=1e-4, rtol=1e-4), "fused path mismatch"

    # Exercise the two-pass tiled-reduction path (used for large N*H*W) with a
    # small forced block cap so the reduction grid has more than one step.
    y2 = jax.block_until_ready(
        batchnorm2d_pallas(x, gamma, beta, force_two_pass=True,
                           block_elems_cap=1024))
    assert y2.shape == (N, C, H, W)
    assert jnp.allclose(y2, y_ref, atol=1e-4, rtol=1e-4), "two-pass path mismatch"

    # Non-128-divisible spatial size (7x7): fused path with full-extent HW block
    # and the two-pass fallback where the HW tile falls back to full HW.
    x2 = jax.random.normal(jax.random.PRNGKey(1), (2, 8, 7, 7), dtype=jnp.float32)
    g8 = jnp.linspace(0.5, 1.5, 8, dtype=jnp.float32)
    b8 = jnp.linspace(-0.2, 0.2, 8, dtype=jnp.float32)
    y3 = jax.block_until_ready(batchnorm2d_pallas(x2, g8, b8))
    y3_ref = _reference_bn(x2, g8, b8)
    assert jnp.allclose(y3, y3_ref, atol=1e-4, rtol=1e-4), "7x7 fused path mismatch"
    y4 = jax.block_until_ready(
        batchnorm2d_pallas(x2, g8, b8, force_two_pass=True, block_elems_cap=2048))
    assert jnp.allclose(y4, y3_ref, atol=1e-4, rtol=1e-4), "7x7 two-pass path mismatch"

    print("KERNEL_OK")
</pallas_src>

<mosaic_0001>
module attributes {stable_mosaic.version = 11 : i64} {
  func.func @_bn_fused_kernel(%arg0: i32, %arg1: memref<2x4x256xf32, #tpu.memory_space<vmem>>, %arg2: memref<4x1xf32, #tpu.memory_space<vmem>>, %arg3: memref<4x1xf32, #tpu.memory_space<vmem>>, %arg4: memref<2x4x256xf32, #tpu.memory_space<vmem>>) attributes {dimension_semantics = [#tpu.dimension_semantics<parallel>], iteration_bounds = array<i64: 1>, scalar_prefetch = 0 : i64, scratch_operands = 0 : i64, tpu.core_type = #tpu.core_type<tc>, window_params = [{transform_indices = @transform_0, window_bounds = array<i64: 2, 4, 256>}, {transform_indices = @transform_1, window_bounds = array<i64: 4, 1>}, {transform_indices = @transform_2, window_bounds = array<i64: 4, 1>}, {transform_indices = @transform_3, window_bounds = array<i64: 2, 4, 256>}]} {
    %c0 = arith.constant 0 : index
    %c0_0 = arith.constant 0 : index
    %c0_1 = arith.constant 0 : index
    %0 = vector.load %arg1[%c0, %c0_0, %c0_1] : memref<2x4x256xf32, #tpu.memory_space<vmem>>, vector<2x4x256xf32>
    %cst = arith.constant dense<0.000000e+00> : vector<4xf32>
    %1 = vector.multi_reduction <add>, %0, %cst [0, 2] : vector<2x4x256xf32> to vector<4xf32>
    %2 = vector.shape_cast %1 : vector<4xf32> to vector<1x4x1xf32>
    %cst_2 = arith.constant 0.001953125 : f32
    %3 = vector.broadcast %cst_2 : f32 to vector<1x4x1xf32>
    %4 = arith.mulf %2, %3 : vector<1x4x1xf32>
    %5 = vector.broadcast %4 : vector<1x4x1xf32> to vector<2x4x256xf32>
    %6 = arith.subf %0, %5 : vector<2x4x256xf32>
    %7 = arith.mulf %6, %6 : vector<2x4x256xf32>
    %cst_3 = arith.constant dense<0.000000e+00> : vector<4xf32>
    %8 = vector.multi_reduction <add>, %7, %cst_3 [0, 2] : vector<2x4x256xf32> to vector<4xf32>
    %9 = vector.shape_cast %8 : vector<4xf32> to vector<1x4x1xf32>
    %cst_4 = arith.constant 0.001953125 : f32
    %10 = vector.broadcast %cst_4 : f32 to vector<1x4x1xf32>
    %11 = arith.mulf %9, %10 : vector<1x4x1xf32>
    %cst_5 = arith.constant 9.99999974E-6 : f32
    %12 = vector.broadcast %cst_5 : f32 to vector<1x4x1xf32>
    %13 = arith.addf %11, %12 : vector<1x4x1xf32>
    %14 = math.rsqrt %13 : vector<1x4x1xf32>
    %c0_6 = arith.constant 0 : index
    %c0_7 = arith.constant 0 : index
    %15 = vector.load %arg2[%c0_6, %c0_7] : memref<4x1xf32, #tpu.memory_space<vmem>>, vector<4x1xf32>
    %16 = vector.shape_cast %15 : vector<4x1xf32> to vector<1x4x1xf32>
    %17 = arith.mulf %16, %14 : vector<1x4x1xf32>
    %18 = vector.broadcast %17 : vector<1x4x1xf32> to vector<2x4x256xf32>
    %19 = arith.mulf %6, %18 : vector<2x4x256xf32>
    %c0_8 = arith.constant 0 : index
    %c0_9 = arith.constant 0 : index
    %20 = vector.load %arg3[%c0_8, %c0_9] : memref<4x1xf32, #tpu.memory_space<vmem>>, vector<4x1xf32>
    %21 = vector.shape_cast %20 : vector<4x1xf32> to vector<1x4x1xf32>
    %22 = vector.broadcast %21 : vector<1x4x1xf32> to vector<2x4x256xf32>
    %23 = arith.addf %19, %22 : vector<2x4x256xf32>
    %c0_10 = arith.constant 0 : index
    %c0_11 = arith.constant 0 : index
    %c0_12 = arith.constant 0 : index
    %24 = vector.load %arg4[%c0_10, %c0_11, %c0_12] : memref<2x4x256xf32, #tpu.memory_space<vmem>>, vector<2x4x256xf32>
    tpu.vector_store %arg4[%c0_10, %c0_11, %c0_12], %23 {strides = array<i32>} : memref<2x4x256xf32, #tpu.memory_space<vmem>>, vector<2x4x256xf32>,
    return
  }
  func.func @transform_0(%arg0: i32) -> (i32, i32, i32) {
    %c0_i32 = arith.constant 0 : i32
    %c0_i32_0 = arith.constant 0 : i32
    %c0_i32_1 = arith.constant 0 : i32
    return %c0_i32, %arg0, %c0_i32_0 : i32, i32, i32
  }
  func.func @transform_1(%arg0: i32) -> (i32, i32) {
    %c0_i32 = arith.constant 0 : i32
    %c0_i32_0 = arith.constant 0 : i32
    return %arg0, %c0_i32 : i32, i32
  }
  func.func @transform_2(%arg0: i32) -> (i32, i32) {
    %c0_i32 = arith.constant 0 : i32
    %c0_i32_0 = arith.constant 0 : i32
    return %arg0, %c0_i32 : i32, i32
  }
  func.func @transform_3(%arg0: i32) -> (i32, i32, i32) {
    %c0_i32 = arith.constant 0 : i32
    %c0_i32_0 = arith.constant 0 : i32
    %c0_i32_1 = arith.constant 0 : i32
    return %c0_i32, %arg0, %c0_i32_0 : i32, i32, i32
  }
}

</mosaic_0001>

<llo_original>
// kernel: tpu_custom_call.1
$region0: #{tpu_custom_call.1}
  #allocation0 [shape = 'u32[]', space=smem, size = 0x4, offset = 0x4, fixed_abs, tag = 'smem constant byte address 0x4 - core index']
  #allocation1 [shape = 'u32[144,128]{1,0:T(1,128)}', space=vmem, size = 0x12000, scoped, tag = 'internal scratch']
  %s0 = inlined_call_operand.hbm [shape: f32[2,4,256], index: 0, kind: input, shape index: {}]
  %s1 = inlined_call_operand.vmem [shape: f32[4,1], index: 1, kind: input, shape index: {}]
  %s2 = inlined_call_operand.vmem [shape: f32[4,1], index: 2, kind: input, shape index: {}]
  %s3 = inlined_call_operand.hbm [shape: f32[2,4,256], index: 3, kind: output, shape index: {}]
  %s4 = sld [smem:[#allocation0]]
  $region26: #{tpu_custom_call.1} parent=0
    _
  %s6 = ssub.s32 1, %s4
  %s7 = scalar_select 0, %s6, %s4
  $region1: #{tpu_custom_call.1} parent=0
    #allocation2 [shape = 'u8[8192]{0}', space=vmem, size = 0x2000, scoped, tag = 'input window, operand 0, single buffered']
    #allocation3 [shape = 's32[1]{0}', space=sflag, size = 0x4, scoped, tag = 'scoped memory for tpu_custom_call.1']
    #allocation4 [shape = 's32[1]{0}', space=sflag, size = 0x4, scoped, tag = 'scoped memory for tpu_custom_call.1']
    #allocation5 [shape = 'u8[8192]{0}', space=vmem, size = 0x2000, scoped, tag = 'output window, operand 0, single buffered']
    %8 = vsyncpa [#allocation3], 0
    %9 = vsyncpa [#allocation4], 0
    // Predicated region
    $region2: #{tpu_custom_call.1} parent=1 // pred_check
      _
    $region3: #{tpu_custom_call.1} parent=1 // pred_check_branch
      %11 = sbr.rel (0) target = $region5
    $region4: #{tpu_custom_call.1} parent=1 // pred_region
      %s13 = ssub.s32 256, 256
      %14 = vsyncadd [#allocation3], %s13
      %s15 = sshll.u32 [#allocation2], 4
      %s16 = int_to_ptr.vmem [resolvable:$true] %s15
      %21 = dma.hbm_to_vmem [thread:$0]  %s0, 256, %s16, [#allocation3], 128, 128, 8
    $region5: #{tpu_custom_call.1} parent=1 // pred_fallthru
      _
    // Predicated region
    $region6: #{tpu_custom_call.1} parent=1 // pred_check
      _
    $region7: #{tpu_custom_call.1} parent=1 // pred_check_branch
      %23 = sbr.rel (0) target = $region9
    $region8: #{tpu_custom_call.1} parent=1 // pred_region
      _
    $region9: #{tpu_custom_call.1} parent=1 // pred_fallthru
      _
    // Predicated region
    $region10: #{tpu_custom_call.1} parent=1 // pred_check
      _
    $region11: #{tpu_custom_call.1} parent=1 // pred_check_branch
      %25 = sbr.rel (0) target = $region13
    $region12: #{tpu_custom_call.1} parent=1 // pred_region
      _
    $region13: #{tpu_custom_call.1} parent=1 // pred_fallthru
      _
    // Predicated region
    $region14: #{tpu_custom_call.1} parent=1 // pred_check
      _
    $region15: #{tpu_custom_call.1} parent=1 // pred_check_branch
      %27 = sbr.rel (0) target = $region17
    $region16: #{tpu_custom_call.1} parent=1 // pred_region
      %28 = dma.done [#allocation3], 256
    $region17: #{tpu_custom_call.1} parent=1 // pred_fallthru
      _
    %v29 = vld [vmem:[#allocation2] sm:$0xff]
    %v30 = vld [vmem:[#allocation2 + $0x8] sm:$0xff]
    %v33 = vcombine.high %v29, %v29
    %v34 = vcombine.high %v30, %v30
    %vm37 = vcmask 1043456
    %v38 = vsel %vm37, %v29, 0.0
    %v39 = vsel %vm37, %v33, 0.0
    %v40 = vadd.f32 %v38, %v39
    %v41 = vsel %vm37, %v30, 0.0
    %v42 = vadd.f32 %v40, %v41
    %v43 = vsel %vm37, %v34, 0.0
    %v44 = vadd.f32 %v42, %v43
    %45 = vadd.xlane.f32.xlu0 %v44
    %v46 = vpop.xlane.xlu0 %45
    %v47 = vmul.f32 %v46, 0.001953125
    %v50 = vunpack.c.l.s4 839922192
    %v51 = vunpack.c.0.s8 %v50
    %v52 = vlaneseq
    %v53 = vshrl.u32 %v52, 7
    %v54 = vsub.s32 %v51, %v53
    %v55 = vrot.slane %v47, %v54
    %v57 = vsub.f32 %v29, %v55
    %v58 = vsub.f32 %v30, %v55
    %v59 = vmul.f32 %v57, %v57
    %v60 = vmul.f32 %v58, %v58
    %v63 = vcombine.high %v59, %v59
    %v64 = vcombine.high %v60, %v60
    %v67 = vsel %vm37, %v59, 0.0
    %v68 = vsel %vm37, %v63, 0.0
    %v69 = vadd.f32 %v67, %v68
    %v70 = vsel %vm37, %v60, 0.0
    %v71 = vadd.f32 %v69, %v70
    %v72 = vsel %vm37, %v64, 0.0
    %v73 = vadd.f32 %v71, %v72
    %74 = vadd.xlane.f32.xlu0 %v73
    %v75 = vpop.xlane.xlu0 %74
    %v76 = vmul.f32 %v75, 0.001953125
    %v77 = vadd.f32 %v76, 1e-05
    %v78 = vrsqrt.pop %v77
    %v79 = vld [vmem:[%s1] sm:$0xf]
    %v80 = vmul.f32 %v79, %v78
    %82 = vset.pattern.permute.xlu0 0
    %83 = vperm.xlu0 %82, %v80
    %v84 = vpop.permute.xlu0 %83
    %v86 = vunpack.c.l.s4 839922192
    %v87 = vunpack.c.0.s8 %v86
    %v88 = vlaneseq
    %v89 = vshrl.u32 %v88, 7
    %v90 = vsub.s32 %v87, %v89
    %v91 = vrot.slane %v84, %v90
    %v93 = vmul.f32 %v57, %v91
    %v94 = vmul.f32 %v58, %v91
    %v95 = vld [vmem:[%s2] sm:$0xf]
    %97 = vset.pattern.permute.xlu0 0
    %98 = vperm.xlu0 %97, %v95
    %v99 = vpop.permute.xlu0 %98
    %v101 = vunpack.c.l.s4 839922192
    %v102 = vunpack.c.0.s8 %v101
    %v103 = vlaneseq
    %v104 = vshrl.u32 %v103, 7
    %v105 = vsub.s32 %v102, %v104
    %v106 = vrot.slane %v99, %v105
    %v108 = vadd.f32 %v93, %v106
    %v109 = vadd.f32 %v94, %v106
    %110 = vst [vmem:[#allocation5] sm:$0xff] %v108
    %111 = vst [vmem:[#allocation5 + $0x8] sm:$0xff] %v109
    // Predicated region
    $region18: #{tpu_custom_call.1} parent=1 // pred_check
      _
    $region19: #{tpu_custom_call.1} parent=1 // pred_check_branch
      %113 = sbr.rel (0) target = $region21
    $region20: #{tpu_custom_call.1} parent=1 // pred_region
      %s115 = ssub.s32 256, 256
      %116 = vsyncadd [#allocation4], %s115
      %s117 = sshll.u32 [#allocation5], 4
      %s118 = int_to_ptr.vmem [resolvable:$true] %s117
      %123 = dma.vmem_to_hbm [thread:$0]  %s118, 256, %s3, [#allocation4], 128, 128, 8
    $region21: #{tpu_custom_call.1} parent=1 // pred_fallthru
      _
    // Predicated region
    $region22: #{tpu_custom_call.1} parent=1 // pred_check
      _
    $region23: #{tpu_custom_call.1} parent=1 // pred_check_branch
      %125 = sbr.rel (0) target = $region25
    $region24: #{tpu_custom_call.1} parent=1 // pred_region
      %126 = dma.done [#allocation4], 256
    $region25: #{tpu_custom_call.1} parent=1 // pred_fallthru
      _
    %127 = vsyncpa [#allocation3], 1
    %128 = vsyncpa [#allocation4], 1

</llo_original>
